<compile_context>
chip_gen: v7x
topology: tpu7x:2x2x1
jax: 0.10.0
libtpu: 0.0.40
codegen_flags: <defaults>
</compile_context>

<pallas_src>
import functools

import jax
import jax.numpy as jnp
from jax import lax
from jax.experimental import pallas as pl
from jax.experimental.pallas import tpu as pltpu


def _regression_kernel(x_ref, w_ref, b_ref, o_ref, band_acc,
                       *, kh, kw, ho, wo, inv_area):
    # x_ref:    (nb, cin, ht, w)      current H tile, NCHW (W on lanes)
    # w_ref:    (kh*kw*cin, cout)     tap-major / ci-minor flattened weight
    # b_ref:    (1, cout)
    # o_ref:    (nb, 1, cout)
    # band_acc: (kh, nb, cin, w) f32  per-ky windowed row-sum accumulators
    j = pl.program_id(1)
    n_h = pl.num_programs(1)
    nb, cin, ht, w_dim = x_ref.shape
    cout = w_ref.shape[-1]

    @pl.when(j == 0)
    def _init():
        band_acc[...] = jnp.zeros_like(band_acc)

    # Every row of this tile contributes to every ky band (halo-free).
    x = x_ref[...].astype(jnp.float32)          # f32 reduction math (v5e-safe)
    tile_sum = jnp.sum(x, axis=2)               # (nb, cin, w): sublane reduce
    for ky in range(kh):
        band_acc[ky] = band_acc[ky] + tile_sum

    # Boundary-row exclusions (read single rows straight from x_ref so the
    # full f32 tile copy need not stay live).
    @pl.when(j == 0)
    def _top_exclusions():
        for ky in range(kh):
            for r in range(ky):                 # global rows 0 .. ky-1
                band_acc[ky] = band_acc[ky] - x_ref[:, :, r, :].astype(jnp.float32)

    @pl.when(j == n_h - 1)
    def _bottom_exclusions_and_finalize():
        for ky in range(kh):
            for r_back in range(kh - 1 - ky):   # bottom (kh-1-ky) global rows
                r = ht - 1 - r_back
                band_acc[ky] = band_acc[ky] - x_ref[:, :, r, :].astype(jnp.float32)

        # Column windowing + single tiny matmul + scale + bias.
        taps = []
        for ky in range(kh):
            band = band_acc[ky]                 # (nb, cin, w)
            col_full = jnp.sum(band, axis=-1)   # (nb, cin): lane reduce (XLU)
            for kx in range(kw):
                t = col_full
                for c in range(kx):             # columns left of the window
                    t = t - band[:, :, c]
                for c in range(kx + wo, w_dim):  # columns right of the window
                    t = t - band[:, :, c]
                taps.append(t)                  # (nb, cin)
        t_all = jnp.concatenate(taps, axis=-1)  # (nb, kh*kw*cin), tap-major
        pooled = jnp.dot(t_all, w_ref[...].astype(jnp.float32),
                         preferred_element_type=jnp.float32)
        pooled = pooled * inv_area + b_ref[...].astype(jnp.float32)
        o_ref[...] = pooled.reshape(nb, 1, cout).astype(o_ref.dtype)


_VMEM_BUDGET = 36 * 1024 * 1024   # conservative vs v7x's 64 MiB scoped VMEM


def _block_cost_bytes(nb, cin, ht, w, itemsize):
    tile = nb * cin * ht * w
    # double-buffered input tile + transient f32 working copy for the row sum
    return 2 * tile * itemsize + tile * 4


def _choose_blocks(n, cin, h, w, itemsize, kh):
    """VMEM-budget-driven (nb, ht). ht divides H and is sublane-aligned."""
    # H-tile candidates: full H, or multiples of 8 that divide H; each must be
    # >= kh-1 so boundary-row exclusions live entirely in the first/last tile.
    h_cands = sorted({d for d in range(8, h, 8) if h % d == 0} | {h})
    h_cands = [d for d in h_cands if d >= max(1, kh - 1)] or [h]

    ht = h_cands[0]
    for d in h_cands:                      # largest H tile that fits the budget
        if _block_cost_bytes(1, cin, d, w, itemsize) <= _VMEM_BUDGET:
            ht = d
    n_h = h // ht

    # Batch block: grow until the per-step tile is "big enough" (~1 MiB DMA),
    # without blowing the budget and without dropping below 4 total grid steps
    # (>= 2 per v7x TensorCore) when the problem naturally has that many.
    nb = 1
    for d in sorted(x for x in range(2, n + 1) if n % x == 0):
        if _block_cost_bytes(d, cin, ht, w, itemsize) > _VMEM_BUDGET:
            break
        if (n // d) * n_h < min(4, n * n_h):
            break
        nb = d
        if nb * cin * ht * w * itemsize >= (1 << 20):
            break
    return nb, ht


def regression_block(x_nchw, weight, bias, *, block_n=None, block_h=None):
    """x_nchw: (N, Cin, H, W); weight: (Cout, Cin, KH, KW); bias: (Cout,)."""
    n, cin, h, w = x_nchw.shape
    cout, cin_w, kh, kw = weight.shape
    assert cin_w == cin
    assert h >= kh and w >= kw, "Feature map smaller than the conv kernel."
    ho, wo = h - kh + 1, w - kw + 1

    # Tiny layout glue on the weights only (the big activation tensor is
    # consumed directly in NCHW — no wrapper transpose).
    w_flat = jnp.transpose(weight, (2, 3, 1, 0)).reshape(kh * kw * cin, cout)
    b2 = bias.reshape(1, cout)

    itemsize = jnp.dtype(x_nchw.dtype).itemsize
    nb, ht = _choose_blocks(n, cin, h, w, itemsize, kh)
    if block_n is not None:
        nb = block_n
    if block_h is not None:
        ht = block_h
    assert n % nb == 0 and h % ht == 0
    assert ht >= kh - 1
    assert ht == h or ht % 8 == 0, "H tile must be sublane-aligned or full H."

    n_h = h // ht
    grid = (n // nb, n_h)

    # Explicit scoped-VMEM limit: cover the block cost with headroom, clamped
    # to stay inside v7x's 64 MiB physical VMEM on every generation.
    needed = _block_cost_bytes(nb, cin, ht, w, itemsize)
    vmem_limit = int(min(48 << 20, max(32 << 20, 2 * needed + (2 << 20))))

    kernel = functools.partial(
        _regression_kernel, kh=kh, kw=kw, ho=ho, wo=wo,
        inv_area=1.0 / float(ho * wo))

    out = pl.pallas_call(
        kernel,
        out_shape=jax.ShapeDtypeStruct((n, 1, cout), x_nchw.dtype),
        grid_spec=pltpu.PrefetchScalarGridSpec(
            num_scalar_prefetch=0,
            grid=grid,
            in_specs=[
                pl.BlockSpec((nb, cin, ht, w), lambda i, j: (i, 0, j, 0)),
                pl.BlockSpec((kh * kw * cin, cout), lambda i, j: (0, 0)),
                pl.BlockSpec((1, cout), lambda i, j: (0, 0)),
            ],
            out_specs=pl.BlockSpec((nb, 1, cout), lambda i, j: (i, 0, 0)),
            scratch_shapes=[pltpu.VMEM((kh, nb, cin, w), jnp.float32)],
        ),
        compiler_params=pltpu.CompilerParams(
            dimension_semantics=("parallel", "arbitrary"),
            vmem_limit_bytes=vmem_limit),
    )(x_nchw, w_flat, b2)

    # Match PyTorch output shape (N, Cout, 1, 1).
    return out.reshape(n, cout, 1, 1)


if __name__ == "__main__":
    N, C_IN, C_OUT, H, W = 2, 4, 8, 16, 16
    KH = KW = 3

    key = jax.random.PRNGKey(0)
    kx, kw_, kb = jax.random.split(key, 3)

    x = jax.random.normal(kx, (N, C_IN, H, W), dtype=jnp.float32)
    # Deterministic synthetic parameters (Conv2d-like init ranges).
    fan_in = C_IN * KH * KW
    bound = 1.0 / (fan_in ** 0.5)
    weight = jax.random.uniform(kw_, (C_OUT, C_IN, KH, KW),
                                minval=-bound, maxval=bound, dtype=jnp.float32)
    bias = jax.random.uniform(kb, (C_OUT,), minval=-bound, maxval=bound,
                              dtype=jnp.float32)

    # Reference (plain JAX).
    ref_conv = lax.conv_general_dilated(
        x, weight, window_strides=(1, 1), padding="VALID",
        dimension_numbers=("NCHW", "OIHW", "NCHW"),
    ) + bias.reshape(1, C_OUT, 1, 1)
    ref = jnp.mean(ref_conv, axis=(2, 3), keepdims=True)

    # 1) Auto-chosen blocking.
    out = jax.block_until_ready(regression_block(x, weight, bias))
    assert out.shape == (N, C_OUT, 1, 1), out.shape
    assert jnp.allclose(out, ref, atol=1e-4, rtol=1e-4), (
        float(jnp.max(jnp.abs(out - ref))))

    # 2) Forced H-tiling (exercises the multi-tile accumulator / pl.when path
    #    used for large feature maps).
    out_tiled = jax.block_until_ready(
        regression_block(x, weight, bias, block_n=1, block_h=8))
    assert jnp.allclose(out_tiled, ref, atol=1e-4, rtol=1e-4), (
        float(jnp.max(jnp.abs(out_tiled - ref))))

    print("KERNEL_OK")
</pallas_src>

<mosaic_0001>
module attributes {stable_mosaic.version = 11 : i64} {
  func.func @_regression_kernel(%arg0: i32, %arg1: i32, %arg2: memref<1x4x16x16xf32, #tpu.memory_space<vmem>>, %arg3: memref<36x8xf32, #tpu.memory_space<vmem>>, %arg4: memref<1x8xf32, #tpu.memory_space<vmem>>, %arg5: memref<1x1x8xf32, #tpu.memory_space<vmem>>, %arg6: memref<3x1x4x16xf32, #tpu.memory_space<vmem>>) attributes {dimension_semantics = [#tpu.dimension_semantics<parallel>, #tpu.dimension_semantics<arbitrary>], iteration_bounds = array<i64: 2, 1>, scalar_prefetch = 0 : i64, scratch_operands = 1 : i64, tpu.core_type = #tpu.core_type<tc>, window_params = [{transform_indices = @transform_0, window_bounds = array<i64: 1, 4, 16, 16>}, {pipeline_mode = #tpu.pipeline_mode<synchronous>, transform_indices = @transform_1, window_bounds = array<i64: 36, 8>}, {pipeline_mode = #tpu.pipeline_mode<synchronous>, transform_indices = @transform_2, window_bounds = array<i64: 1, 8>}, {transform_indices = @transform_3, window_bounds = array<i64: 1, 1, 8>}]} {
    %c0_i32 = arith.constant 0 : i32
    %0 = arith.cmpi eq, %arg1, %c0_i32 : i32
    %1 = arith.extui %0 : i1 to i32
    %c0_i32_0 = arith.constant 0 : i32
    %2 = arith.cmpi ne, %1, %c0_i32_0 : i32
    scf.if %2 {
      %cst_30 = arith.constant 0.000000e+00 : f32
      %29 = vector.broadcast %cst_30 : f32 to vector<3x1x4x16xf32>
      %c0_31 = arith.constant 0 : index
      %c0_32 = arith.constant 0 : index
      %c0_33 = arith.constant 0 : index
      %c0_34 = arith.constant 0 : index
      %30 = vector.load %arg6[%c0_31, %c0_32, %c0_33, %c0_34] : memref<3x1x4x16xf32, #tpu.memory_space<vmem>>, vector<3x1x4x16xf32>
      tpu.vector_store %arg6[%c0_31, %c0_32, %c0_33, %c0_34], %29 {strides = array<i32>} : memref<3x1x4x16xf32, #tpu.memory_space<vmem>>, vector<3x1x4x16xf32>,
    } else {
    }
    %c0 = arith.constant 0 : index
    %c0_1 = arith.constant 0 : index
    %c0_2 = arith.constant 0 : index
    %c0_3 = arith.constant 0 : index
    %3 = vector.load %arg2[%c0, %c0_1, %c0_2, %c0_3] : memref<1x4x16x16xf32, #tpu.memory_space<vmem>>, vector<1x4x16x16xf32>
    %cst = arith.constant dense<0.000000e+00> : vector<1x4x16xf32>
    %4 = vector.multi_reduction <add>, %3, %cst [2] : vector<1x4x16x16xf32> to vector<1x4x16xf32>
    %c0_4 = arith.constant 0 : index
    %c0_5 = arith.constant 0 : index
    %c0_6 = arith.constant 0 : index
    %c0_7 = arith.constant 0 : index
    %5 = vector.load %arg6[%c0_4, %c0_5, %c0_6, %c0_7] : memref<3x1x4x16xf32, #tpu.memory_space<vmem>>, vector<1x1x4x16xf32>
    %6 = vector.shape_cast %5 : vector<1x1x4x16xf32> to vector<1x4x16xf32>
    %7 = arith.addf %6, %4 : vector<1x4x16xf32>
    %c0_8 = arith.constant 0 : index
    %c0_9 = arith.constant 0 : index
    %c0_10 = arith.constant 0 : index
    %c0_11 = arith.constant 0 : index
    %8 = vector.load %arg6[%c0_8, %c0_9, %c0_10, %c0_11] : memref<3x1x4x16xf32, #tpu.memory_space<vmem>>, vector<1x1x4x16xf32>
    %9 = vector.shape_cast %8 : vector<1x1x4x16xf32> to vector<1x4x16xf32>
    %10 = vector.shape_cast %7 : vector<1x4x16xf32> to vector<1x1x4x16xf32>
    tpu.vector_store %arg6[%c0_8, %c0_9, %c0_10, %c0_11], %10 {strides = array<i32>} : memref<3x1x4x16xf32, #tpu.memory_space<vmem>>, vector<1x1x4x16xf32>,
    %c1 = arith.constant 1 : index
    %c0_12 = arith.constant 0 : index
    %c0_13 = arith.constant 0 : index
    %c0_14 = arith.constant 0 : index
    %11 = vector.load %arg6[%c1, %c0_12, %c0_13, %c0_14] : memref<3x1x4x16xf32, #tpu.memory_space<vmem>>, vector<1x1x4x16xf32>
    %12 = vector.shape_cast %11 : vector<1x1x4x16xf32> to vector<1x4x16xf32>
    %13 = arith.addf %12, %4 : vector<1x4x16xf32>
    %c1_15 = arith.constant 1 : index
    %c0_16 = arith.constant 0 : index
    %c0_17 = arith.constant 0 : index
    %c0_18 = arith.constant 0 : index
    %14 = vector.load %arg6[%c1_15, %c0_16, %c0_17, %c0_18] : memref<3x1x4x16xf32, #tpu.memory_space<vmem>>, vector<1x1x4x16xf32>
    %15 = vector.shape_cast %14 : vector<1x1x4x16xf32> to vector<1x4x16xf32>
    %16 = vector.shape_cast %13 : vector<1x4x16xf32> to vector<1x1x4x16xf32>
    tpu.vector_store %arg6[%c1_15, %c0_16, %c0_17, %c0_18], %16 {strides = array<i32>} : memref<3x1x4x16xf32, #tpu.memory_space<vmem>>, vector<1x1x4x16xf32>,
    %c2 = arith.constant 2 : index
    %c0_19 = arith.constant 0 : index
    %c0_20 = arith.constant 0 : index
    %c0_21 = arith.constant 0 : index
    %17 = vector.load %arg6[%c2, %c0_19, %c0_20, %c0_21] : memref<3x1x4x16xf32, #tpu.memory_space<vmem>>, vector<1x1x4x16xf32>
    %18 = vector.shape_cast %17 : vector<1x1x4x16xf32> to vector<1x4x16xf32>
    %19 = arith.addf %18, %4 : vector<1x4x16xf32>
    %c2_22 = arith.constant 2 : index
    %c0_23 = arith.constant 0 : index
    %c0_24 = arith.constant 0 : index
    %c0_25 = arith.constant 0 : index
    %20 = vector.load %arg6[%c2_22, %c0_23, %c0_24, %c0_25] : memref<3x1x4x16xf32, #tpu.memory_space<vmem>>, vector<1x1x4x16xf32>
    %21 = vector.shape_cast %20 : vector<1x1x4x16xf32> to vector<1x4x16xf32>
    %22 = vector.shape_cast %19 : vector<1x4x16xf32> to vector<1x1x4x16xf32>
    tpu.vector_store %arg6[%c2_22, %c0_23, %c0_24, %c0_25], %22 {strides = array<i32>} : memref<3x1x4x16xf32, #tpu.memory_space<vmem>>, vector<1x1x4x16xf32>,
    %c0_i32_26 = arith.constant 0 : i32
    %23 = arith.cmpi eq, %arg1, %c0_i32_26 : i32
    %24 = arith.extui %23 : i1 to i32
    %c0_i32_27 = arith.constant 0 : i32
    %25 = arith.cmpi ne, %24, %c0_i32_27 : i32
    scf.if %25 {
      %c1_30 = arith.constant 1 : index
      %c0_31 = arith.constant 0 : index
      %c0_32 = arith.constant 0 : index
      %c0_33 = arith.constant 0 : index
      %29 = vector.load %arg6[%c1_30, %c0_31, %c0_32, %c0_33] : memref<3x1x4x16xf32, #tpu.memory_space<vmem>>, vector<1x1x4x16xf32>
      %30 = vector.shape_cast %29 : vector<1x1x4x16xf32> to vector<1x4x16xf32>
      %c0_34 = arith.constant 0 : index
      %c0_35 = arith.constant 0 : index
      %c0_36 = arith.constant 0 : index
      %c0_37 = arith.constant 0 : index
      %31 = vector.load %arg2[%c0_34, %c0_35, %c0_36, %c0_37] : memref<1x4x16x16xf32, #tpu.memory_space<vmem>>, vector<1x4x1x16xf32>
      %32 = vector.shape_cast %31 : vector<1x4x1x16xf32> to vector<1x4x16xf32>
      %33 = arith.subf %30, %32 : vector<1x4x16xf32>
      %c1_38 = arith.constant 1 : index
      %c0_39 = arith.constant 0 : index
      %c0_40 = arith.constant 0 : index
      %c0_41 = arith.constant 0 : index
      %34 = vector.load %arg6[%c1_38, %c0_39, %c0_40, %c0_41] : memref<3x1x4x16xf32, #tpu.memory_space<vmem>>, vector<1x1x4x16xf32>
      %35 = vector.shape_cast %34 : vector<1x1x4x16xf32> to vector<1x4x16xf32>
      %36 = vector.shape_cast %33 : vector<1x4x16xf32> to vector<1x1x4x16xf32>
      tpu.vector_store %arg6[%c1_38, %c0_39, %c0_40, %c0_41], %36 {strides = array<i32>} : memref<3x1x4x16xf32, #tpu.memory_space<vmem>>, vector<1x1x4x16xf32>,
      %c2_42 = arith.constant 2 : index
      %c0_43 = arith.constant 0 : index
      %c0_44 = arith.constant 0 : index
      %c0_45 = arith.constant 0 : index
      %37 = vector.load %arg6[%c2_42, %c0_43, %c0_44, %c0_45] : memref<3x1x4x16xf32, #tpu.memory_space<vmem>>, vector<1x1x4x16xf32>
      %38 = vector.shape_cast %37 : vector<1x1x4x16xf32> to vector<1x4x16xf32>
      %c0_46 = arith.constant 0 : index
      %c0_47 = arith.constant 0 : index
      %c0_48 = arith.constant 0 : index
      %c0_49 = arith.constant 0 : index
      %39 = vector.load %arg2[%c0_46, %c0_47, %c0_48, %c0_49] : memref<1x4x16x16xf32, #tpu.memory_space<vmem>>, vector<1x4x1x16xf32>
      %40 = vector.shape_cast %39 : vector<1x4x1x16xf32> to vector<1x4x16xf32>
      %41 = arith.subf %38, %40 : vector<1x4x16xf32>
      %c2_50 = arith.constant 2 : index
      %c0_51 = arith.constant 0 : index
      %c0_52 = arith.constant 0 : index
      %c0_53 = arith.constant 0 : index
      %42 = vector.load %arg6[%c2_50, %c0_51, %c0_52, %c0_53] : memref<3x1x4x16xf32, #tpu.memory_space<vmem>>, vector<1x1x4x16xf32>
      %43 = vector.shape_cast %42 : vector<1x1x4x16xf32> to vector<1x4x16xf32>
      %44 = vector.shape_cast %41 : vector<1x4x16xf32> to vector<1x1x4x16xf32>
      tpu.vector_store %arg6[%c2_50, %c0_51, %c0_52, %c0_53], %44 {strides = array<i32>} : memref<3x1x4x16xf32, #tpu.memory_space<vmem>>, vector<1x1x4x16xf32>,
      %c2_54 = arith.constant 2 : index
      %c0_55 = arith.constant 0 : index
      %c0_56 = arith.constant 0 : index
      %c0_57 = arith.constant 0 : index
      %45 = vector.load %arg6[%c2_54, %c0_55, %c0_56, %c0_57] : memref<3x1x4x16xf32, #tpu.memory_space<vmem>>, vector<1x1x4x16xf32>
      %46 = vector.shape_cast %45 : vector<1x1x4x16xf32> to vector<1x4x16xf32>
      %c0_58 = arith.constant 0 : index
      %c0_59 = arith.constant 0 : index
      %c1_60 = arith.constant 1 : index
      %c0_61 = arith.constant 0 : index
      %47 = vector.load %arg2[%c0_58, %c0_59, %c1_60, %c0_61] : memref<1x4x16x16xf32, #tpu.memory_space<vmem>>, vector<1x4x1x16xf32>
      %48 = vector.shape_cast %47 : vector<1x4x1x16xf32> to vector<1x4x16xf32>
      %49 = arith.subf %46, %48 : vector<1x4x16xf32>
      %c2_62 = arith.constant 2 : index
      %c0_63 = arith.constant 0 : index
      %c0_64 = arith.constant 0 : index
      %c0_65 = arith.constant 0 : index
      %50 = vector.load %arg6[%c2_62, %c0_63, %c0_64, %c0_65] : memref<3x1x4x16xf32, #tpu.memory_space<vmem>>, vector<1x1x4x16xf32>
      %51 = vector.shape_cast %50 : vector<1x1x4x16xf32> to vector<1x4x16xf32>
      %52 = vector.shape_cast %49 : vector<1x4x16xf32> to vector<1x1x4x16xf32>
      tpu.vector_store %arg6[%c2_62, %c0_63, %c0_64, %c0_65], %52 {strides = array<i32>} : memref<3x1x4x16xf32, #tpu.memory_space<vmem>>, vector<1x1x4x16xf32>,
    } else {
    }
    %c0_i32_28 = arith.constant 0 : i32
    %26 = arith.cmpi eq, %arg1, %c0_i32_28 : i32
    %27 = arith.extui %26 : i1 to i32
    %c0_i32_29 = arith.constant 0 : i32
    %28 = arith.cmpi ne, %27, %c0_i32_29 : i32
    scf.if %28 {
      %c0_30 = arith.constant 0 : index
      %c0_31 = arith.constant 0 : index
      %c0_32 = arith.constant 0 : index
      %c0_33 = arith.constant 0 : index
      %29 = vector.load %arg6[%c0_30, %c0_31, %c0_32, %c0_33] : memref<3x1x4x16xf32, #tpu.memory_space<vmem>>, vector<1x1x4x16xf32>
      %30 = vector.shape_cast %29 : vector<1x1x4x16xf32> to vector<1x4x16xf32>
      %c0_34 = arith.constant 0 : index
      %c0_35 = arith.constant 0 : index
      %c15 = arith.constant 15 : index
      %c0_36 = arith.constant 0 : index
      %31 = vector.load %arg2[%c0_34, %c0_35, %c15, %c0_36] : memref<1x4x16x16xf32, #tpu.memory_space<vmem>>, vector<1x4x1x16xf32>
      %32 = vector.shape_cast %31 : vector<1x4x1x16xf32> to vector<1x4x16xf32>
      %33 = arith.subf %30, %32 : vector<1x4x16xf32>
      %c0_37 = arith.constant 0 : index
      %c0_38 = arith.constant 0 : index
      %c0_39 = arith.constant 0 : index
      %c0_40 = arith.constant 0 : index
      %34 = vector.load %arg6[%c0_37, %c0_38, %c0_39, %c0_40] : memref<3x1x4x16xf32, #tpu.memory_space<vmem>>, vector<1x1x4x16xf32>
      %35 = vector.shape_cast %34 : vector<1x1x4x16xf32> to vector<1x4x16xf32>
      %36 = vector.shape_cast %33 : vector<1x4x16xf32> to vector<1x1x4x16xf32>
      tpu.vector_store %arg6[%c0_37, %c0_38, %c0_39, %c0_40], %36 {strides = array<i32>} : memref<3x1x4x16xf32, #tpu.memory_space<vmem>>, vector<1x1x4x16xf32>,
      %c0_41 = arith.constant 0 : index
      %c0_42 = arith.constant 0 : index
      %c0_43 = arith.constant 0 : index
      %c0_44 = arith.constant 0 : index
      %37 = vector.load %arg6[%c0_41, %c0_42, %c0_43, %c0_44] : memref<3x1x4x16xf32, #tpu.memory_space<vmem>>, vector<1x1x4x16xf32>
      %38 = vector.shape_cast %37 : vector<1x1x4x16xf32> to vector<1x4x16xf32>
      %c0_45 = arith.constant 0 : index
      %c0_46 = arith.constant 0 : index
      %c14 = arith.constant 14 : index
      %c0_47 = arith.constant 0 : index
      %39 = vector.load %arg2[%c0_45, %c0_46, %c14, %c0_47] : memref<1x4x16x16xf32, #tpu.memory_space<vmem>>, vector<1x4x1x16xf32>
      %40 = vector.shape_cast %39 : vector<1x4x1x16xf32> to vector<1x4x16xf32>
      %41 = arith.subf %38, %40 : vector<1x4x16xf32>
      %c0_48 = arith.constant 0 : index
      %c0_49 = arith.constant 0 : index
      %c0_50 = arith.constant 0 : index
      %c0_51 = arith.constant 0 : index
      %42 = vector.load %arg6[%c0_48, %c0_49, %c0_50, %c0_51] : memref<3x1x4x16xf32, #tpu.memory_space<vmem>>, vector<1x1x4x16xf32>
      %43 = vector.shape_cast %42 : vector<1x1x4x16xf32> to vector<1x4x16xf32>
      %44 = vector.shape_cast %41 : vector<1x4x16xf32> to vector<1x1x4x16xf32>
      tpu.vector_store %arg6[%c0_48, %c0_49, %c0_50, %c0_51], %44 {strides = array<i32>} : memref<3x1x4x16xf32, #tpu.memory_space<vmem>>, vector<1x1x4x16xf32>,
      %c1_52 = arith.constant 1 : index
      %c0_53 = arith.constant 0 : index
      %c0_54 = arith.constant 0 : index
      %c0_55 = arith.constant 0 : index
      %45 = vector.load %arg6[%c1_52, %c0_53, %c0_54, %c0_55] : memref<3x1x4x16xf32, #tpu.memory_space<vmem>>, vector<1x1x4x16xf32>
      %46 = vector.shape_cast %45 : vector<1x1x4x16xf32> to vector<1x4x16xf32>
      %c0_56 = arith.constant 0 : index
      %c0_57 = arith.constant 0 : index
      %c15_58 = arith.constant 15 : index
      %c0_59 = arith.constant 0 : index
      %47 = vector.load %arg2[%c0_56, %c0_57, %c15_58, %c0_59] : memref<1x4x16x16xf32, #tpu.memory_space<vmem>>, vector<1x4x1x16xf32>
      %48 = vector.shape_cast %47 : vector<1x4x1x16xf32> to vector<1x4x16xf32>
      %49 = arith.subf %46, %48 : vector<1x4x16xf32>
      %c1_60 = arith.constant 1 : index
      %c0_61 = arith.constant 0 : index
      %c0_62 = arith.constant 0 : index
      %c0_63 = arith.constant 0 : index
      %50 = vector.load %arg6[%c1_60, %c0_61, %c0_62, %c0_63] : memref<3x1x4x16xf32, #tpu.memory_space<vmem>>, vector<1x1x4x16xf32>
      %51 = vector.shape_cast %50 : vector<1x1x4x16xf32> to vector<1x4x16xf32>
      %52 = vector.shape_cast %49 : vector<1x4x16xf32> to vector<1x1x4x16xf32>
      tpu.vector_store %arg6[%c1_60, %c0_61, %c0_62, %c0_63], %52 {strides = array<i32>} : memref<3x1x4x16xf32, #tpu.memory_space<vmem>>, vector<1x1x4x16xf32>,
      %c0_64 = arith.constant 0 : index
      %c0_65 = arith.constant 0 : index
      %c0_66 = arith.constant 0 : index
      %c0_67 = arith.constant 0 : index
      %53 = vector.load %arg6[%c0_64, %c0_65, %c0_66, %c0_67] : memref<3x1x4x16xf32, #tpu.memory_space<vmem>>, vector<1x1x4x16xf32>
      %54 = vector.shape_cast %53 : vector<1x1x4x16xf32> to vector<1x4x16xf32>
      %cst_68 = arith.constant dense<0.000000e+00> : vector<1x4xf32>
      %55 = vector.multi_reduction <add>, %54, %cst_68 [2] : vector<1x4x16xf32> to vector<1x4xf32>
      %56 = vector.extract_strided_slice %54 {offsets = [0, 0, 14], sizes = [1, 4, 1], strides = [1, 1, 1]} : vector<1x4x16xf32> to vector<1x4x1xf32>
      %57 = vector.shape_cast %56 : vector<1x4x1xf32> to vector<1x4xf32>
      %58 = arith.subf %55, %57 : vector<1x4xf32>
      %59 = vector.extract_strided_slice %54 {offsets = [0, 0, 15], sizes = [1, 4, 1], strides = [1, 1, 1]} : vector<1x4x16xf32> to vector<1x4x1xf32>
      %60 = vector.shape_cast %59 : vector<1x4x1xf32> to vector<1x4xf32>
      %61 = arith.subf %58, %60 : vector<1x4xf32>
      %62 = vector.extract_strided_slice %54 {offsets = [0, 0, 0], sizes = [1, 4, 1], strides = [1, 1, 1]} : vector<1x4x16xf32> to vector<1x4x1xf32>
      %63 = vector.shape_cast %62 : vector<1x4x1xf32> to vector<1x4xf32>
      %64 = arith.subf %55, %63 : vector<1x4xf32>
      %65 = vector.extract_strided_slice %54 {offsets = [0, 0, 15], sizes = [1, 4, 1], strides = [1, 1, 1]} : vector<1x4x16xf32> to vector<1x4x1xf32>
      %66 = vector.shape_cast %65 : vector<1x4x1xf32> to vector<1x4xf32>
      %67 = arith.subf %64, %66 : vector<1x4xf32>
      %68 = vector.extract_strided_slice %54 {offsets = [0, 0, 0], sizes = [1, 4, 1], strides = [1, 1, 1]} : vector<1x4x16xf32> to vector<1x4x1xf32>
      %69 = vector.shape_cast %68 : vector<1x4x1xf32> to vector<1x4xf32>
      %70 = arith.subf %55, %69 : vector<1x4xf32>
      %71 = vector.extract_strided_slice %54 {offsets = [0, 0, 1], sizes = [1, 4, 1], strides = [1, 1, 1]} : vector<1x4x16xf32> to vector<1x4x1xf32>
      %72 = vector.shape_cast %71 : vector<1x4x1xf32> to vector<1x4xf32>
      %73 = arith.subf %70, %72 : vector<1x4xf32>
      %c1_69 = arith.constant 1 : index
      %c0_70 = arith.constant 0 : index
      %c0_71 = arith.constant 0 : index
      %c0_72 = arith.constant 0 : index
      %74 = vector.load %arg6[%c1_69, %c0_70, %c0_71, %c0_72] : memref<3x1x4x16xf32, #tpu.memory_space<vmem>>, vector<1x1x4x16xf32>
      %75 = vector.shape_cast %74 : vector<1x1x4x16xf32> to vector<1x4x16xf32>
      %cst_73 = arith.constant dense<0.000000e+00> : vector<1x4xf32>
      %76 = vector.multi_reduction <add>, %75, %cst_73 [2] : vector<1x4x16xf32> to vector<1x4xf32>
      %77 = vector.extract_strided_slice %75 {offsets = [0, 0, 14], sizes = [1, 4, 1], strides = [1, 1, 1]} : vector<1x4x16xf32> to vector<1x4x1xf32>
      %78 = vector.shape_cast %77 : vector<1x4x1xf32> to vector<1x4xf32>
      %79 = arith.subf %76, %78 : vector<1x4xf32>
      %80 = vector.extract_strided_slice %75 {offsets = [0, 0, 15], sizes = [1, 4, 1], strides = [1, 1, 1]} : vector<1x4x16xf32> to vector<1x4x1xf32>
      %81 = vector.shape_cast %80 : vector<1x4x1xf32> to vector<1x4xf32>
      %82 = arith.subf %79, %81 : vector<1x4xf32>
      %83 = vector.extract_strided_slice %75 {offsets = [0, 0, 0], sizes = [1, 4, 1], strides = [1, 1, 1]} : vector<1x4x16xf32> to vector<1x4x1xf32>
      %84 = vector.shape_cast %83 : vector<1x4x1xf32> to vector<1x4xf32>
      %85 = arith.subf %76, %84 : vector<1x4xf32>
      %86 = vector.extract_strided_slice %75 {offsets = [0, 0, 15], sizes = [1, 4, 1], strides = [1, 1, 1]} : vector<1x4x16xf32> to vector<1x4x1xf32>
      %87 = vector.shape_cast %86 : vector<1x4x1xf32> to vector<1x4xf32>
      %88 = arith.subf %85, %87 : vector<1x4xf32>
      %89 = vector.extract_strided_slice %75 {offsets = [0, 0, 0], sizes = [1, 4, 1], strides = [1, 1, 1]} : vector<1x4x16xf32> to vector<1x4x1xf32>
      %90 = vector.shape_cast %89 : vector<1x4x1xf32> to vector<1x4xf32>
      %91 = arith.subf %76, %90 : vector<1x4xf32>
      %92 = vector.extract_strided_slice %75 {offsets = [0, 0, 1], sizes = [1, 4, 1], strides = [1, 1, 1]} : vector<1x4x16xf32> to vector<1x4x1xf32>
      %93 = vector.shape_cast %92 : vector<1x4x1xf32> to vector<1x4xf32>
      %94 = arith.subf %91, %93 : vector<1x4xf32>
      %c2_74 = arith.constant 2 : index
      %c0_75 = arith.constant 0 : index
      %c0_76 = arith.constant 0 : index
      %c0_77 = arith.constant 0 : index
      %95 = vector.load %arg6[%c2_74, %c0_75, %c0_76, %c0_77] : memref<3x1x4x16xf32, #tpu.memory_space<vmem>>, vector<1x1x4x16xf32>
      %96 = vector.shape_cast %95 : vector<1x1x4x16xf32> to vector<1x4x16xf32>
      %cst_78 = arith.constant dense<0.000000e+00> : vector<1x4xf32>
      %97 = vector.multi_reduction <add>, %96, %cst_78 [2] : vector<1x4x16xf32> to vector<1x4xf32>
      %98 = vector.extract_strided_slice %96 {offsets = [0, 0, 14], sizes = [1, 4, 1], strides = [1, 1, 1]} : vector<1x4x16xf32> to vector<1x4x1xf32>
      %99 = vector.shape_cast %98 : vector<1x4x1xf32> to vector<1x4xf32>
      %100 = arith.subf %97, %99 : vector<1x4xf32>
      %101 = vector.extract_strided_slice %96 {offsets = [0, 0, 15], sizes = [1, 4, 1], strides = [1, 1, 1]} : vector<1x4x16xf32> to vector<1x4x1xf32>
      %102 = vector.shape_cast %101 : vector<1x4x1xf32> to vector<1x4xf32>
      %103 = arith.subf %100, %102 : vector<1x4xf32>
      %104 = vector.extract_strided_slice %96 {offsets = [0, 0, 0], sizes = [1, 4, 1], strides = [1, 1, 1]} : vector<1x4x16xf32> to vector<1x4x1xf32>
      %105 = vector.shape_cast %104 : vector<1x4x1xf32> to vector<1x4xf32>
      %106 = arith.subf %97, %105 : vector<1x4xf32>
      %107 = vector.extract_strided_slice %96 {offsets = [0, 0, 15], sizes = [1, 4, 1], strides = [1, 1, 1]} : vector<1x4x16xf32> to vector<1x4x1xf32>
      %108 = vector.shape_cast %107 : vector<1x4x1xf32> to vector<1x4xf32>
      %109 = arith.subf %106, %108 : vector<1x4xf32>
      %110 = vector.extract_strided_slice %96 {offsets = [0, 0, 0], sizes = [1, 4, 1], strides = [1, 1, 1]} : vector<1x4x16xf32> to vector<1x4x1xf32>
      %111 = vector.shape_cast %110 : vector<1x4x1xf32> to vector<1x4xf32>
      %112 = arith.subf %97, %111 : vector<1x4xf32>
      %113 = vector.extract_strided_slice %96 {offsets = [0, 0, 1], sizes = [1, 4, 1], strides = [1, 1, 1]} : vector<1x4x16xf32> to vector<1x4x1xf32>
      %114 = vector.shape_cast %113 : vector<1x4x1xf32> to vector<1x4xf32>
      %115 = arith.subf %112, %114 : vector<1x4xf32>
      %116 = tpu.concatenate %61, %67, %73, %82, %88, %94, %103, %109, %115 in 1 : vector<1x4xf32>, vector<1x4xf32>, vector<1x4xf32>, vector<1x4xf32>, vector<1x4xf32>, vector<1x4xf32>, vector<1x4xf32>, vector<1x4xf32>, vector<1x4xf32> -> vector<1x36xf32>
      %c0_79 = arith.constant 0 : index
      %c0_80 = arith.constant 0 : index
      %117 = vector.load %arg3[%c0_79, %c0_80] : memref<36x8xf32, #tpu.memory_space<vmem>>, vector<36x8xf32>
      %cst_81 = arith.constant dense<0.000000e+00> : vector<1x8xf32>
      %118 = tpu.matmul %116, %117, %cst_81 {dimension_numbers = #tpu.dot_dimension_numbers<[1], [0], [0], [1], [0, 0, 1, 1], [], []>} : vector<1x36xf32>, vector<36x8xf32>, vector<1x8xf32> -> vector<1x8xf32>
      %cst_82 = arith.constant 0.00510204071 : f32
      %119 = vector.broadcast %cst_82 : f32 to vector<1x8xf32>
      %120 = arith.mulf %118, %119 : vector<1x8xf32>
      %c0_83 = arith.constant 0 : index
      %c0_84 = arith.constant 0 : index
      %121 = vector.load %arg4[%c0_83, %c0_84] : memref<1x8xf32, #tpu.memory_space<vmem>>, vector<1x8xf32>
      %122 = arith.addf %120, %121 : vector<1x8xf32>
      %123 = vector.shape_cast %122 : vector<1x8xf32> to vector<1x1x8xf32>
      %c0_85 = arith.constant 0 : index
      %c0_86 = arith.constant 0 : index
      %c0_87 = arith.constant 0 : index
      %124 = vector.load %arg5[%c0_85, %c0_86, %c0_87] : memref<1x1x8xf32, #tpu.memory_space<vmem>>, vector<1x1x8xf32>
      tpu.vector_store %arg5[%c0_85, %c0_86, %c0_87], %123 {strides = array<i32>} : memref<1x1x8xf32, #tpu.memory_space<vmem>>, vector<1x1x8xf32>,
    } else {
    }
    return
  }
  func.func @transform_0(%arg0: i32, %arg1: i32) -> (i32, i32, i32, i32) {
    %c0_i32 = arith.constant 0 : i32
    %c0_i32_0 = arith.constant 0 : i32
    %c0_i32_1 = arith.constant 0 : i32
    return %arg0, %c0_i32, %arg1, %c0_i32_0 : i32, i32, i32, i32
  }
  func.func @transform_1(%arg0: i32, %arg1: i32) -> (i32, i32) {
    %c0_i32 = arith.constant 0 : i32
    %c0_i32_0 = arith.constant 0 : i32
    %c0_i32_1 = arith.constant 0 : i32
    return %c0_i32, %c0_i32_0 : i32, i32
  }
  func.func @transform_2(%arg0: i32, %arg1: i32) -> (i32, i32) {
    %c0_i32 = arith.constant 0 : i32
    %c0_i32_0 = arith.constant 0 : i32
    %c0_i32_1 = arith.constant 0 : i32
    return %c0_i32, %c0_i32_0 : i32, i32
  }
  func.func @transform_3(%arg0: i32, %arg1: i32) -> (i32, i32, i32) {
    %c0_i32 = arith.constant 0 : i32
    %c0_i32_0 = arith.constant 0 : i32
    %c0_i32_1 = arith.constant 0 : i32
    return %arg0, %c0_i32, %c0_i32_0 : i32, i32, i32
  }
}

</mosaic_0001>

<llo_original>
// kernel: tpu_custom_call.1
$region0: #{tpu_custom_call.1}
  #allocation0 [shape = 'u32[]', space=smem, size = 0x4, offset = 0x4, fixed_abs, tag = 'smem constant byte address 0x4 - core index']
  #allocation1 [shape = 'u32[144,128]{1,0:T(1,128)}', space=vmem, size = 0x12000, scoped, tag = 'internal scratch']
  #allocation2 [shape = 'f32[3,1,4,16]{3,2,1,0:T(4,128)}', space=vmem, size = 0x1800, scoped, tag = 'scratch operand']
  %s0 = inlined_call_operand.hbm [shape: f32[2,4,16,16], index: 0, kind: input, shape index: {}]
  %s1 = inlined_call_operand.vmem [shape: f32[36,8], index: 1, kind: input, shape index: {}]
  %s2 = inlined_call_operand.vmem [shape: f32[1,8], index: 2, kind: input, shape index: {}]
  %s3 = inlined_call_operand.hbm [shape: f32[2,1,8], index: 3, kind: output, shape index: {}]
  %s4 = sld [smem:[#allocation0]]
  $region57: #{tpu_custom_call.1} parent=0
    _
  %s6 = ssub.s32 1, %s4
  %s7 = scalar_select 0, %s6, %s4
  $region1: #{tpu_custom_call.1} parent=0
    #allocation3 [shape = 'u8[65536]{0}', space=vmem, size = 0x10000, scoped, tag = 'input window, operand 0']
    #allocation4 [shape = 's32[2]{0}', space=sflag, size = 0x8, scoped, tag = 'scoped memory for tpu_custom_call.1']
    #allocation5 [shape = 's32[2]{0}', space=sflag, size = 0x8, scoped, tag = 'scoped memory for tpu_custom_call.1']
    #allocation6 [shape = 'u8[1024]{0}', space=vmem, size = 0x400, scoped, tag = 'output window, operand 0']
    %8 = vsyncpa [#allocation4], 0
    %s9 = scalar_lea.sflag [#allocation4], 1
    %10 = vsyncpa %s9, 0
    %11 = vsyncpa [#allocation5], 0
    %s12 = scalar_lea.sflag [#allocation5], 1
    %13 = vsyncpa %s12, 0
    loop: start=0, step=1, limit=4
    $region2: #{tpu_custom_call.1} parent=1 // loop_pre_header
      _
    $region3: #{tpu_custom_call.1} parent=1 // loop_header
      %s15 = sphi 0, %s19
      %p16 = scmp.ge.s32.totalorder %s15, 4
      %s22 = sphi 0, %s34
      %s23 = sphi 0, %s30
      %s24 = sphi 0, %s22
      %s25 = sphi 0, %s23
      %s26 = sphi 0, %s24
      %s27 = sphi 0, %s25
      %s39 = sphi 0, %s41
      %s42 = sphi 0, %s39
      %s43 = sphi 0, %s42
      %s59 = sphi 0, %s43
      %s63 = sphi 0, %s63
      %s65 = sphi 0, %s63
      %s66 = sphi 0, %s65
      %s80 = sphi 0, %s66
      %s84 = sphi 0, %s84
      %s86 = sphi 0, %s84
      %s87 = sphi 0, %s86
      %s101 = sphi 0, %s87
      %s107 = sphi 0, %s109
      %s110 = sphi 0, %s107
      %s111 = sphi 0, %s110
      %s127 = sphi 0, %s111
    $region4: #{tpu_custom_call.1} parent=1 // loop_header_branch
      %18 = sbr.rel (%p16) target = $region8
    $region5: #{tpu_custom_call.1} parent=1 // loop_body
      %s20 = ssub.s32 %s15, 1
      %s21 = ssub.s32 %s15, 2
      %s28 = sadd.s32 1, %s23
      %p29 = scmp.ge.s32.totalorder %s28, 1
      %s30 = scalar_select %p29, 0, %s28
      %s31 = sadd.s32 1, %s22
      %s32 = scalar_select %p29, %s31, %s22
      %p33 = scmp.ge.s32.totalorder %s32, 2
      %s34 = scalar_select %p33, 0, %s32
      %s35 = ssub.s32 %s22, %s34
      %s36 = ssub.s32 %s23, %s30
      %s37 = sor.u32 %s35, %s36
      %p38 = scmp.eq.s32.totalorder %s37, 0
      %s40 = sadd.s32 %s39, 1
      %s41 = scalar_select %p38, %s39, %s40
      %p44 = pneg %p38
      %p45 = scmp.eq.s32.totalorder %s15, 1
      %p46 = por %p44, %p45
      %p47 = scmp.ne.s32.totalorder %s39, %s42
      %p48 = scmp.eq.s32.totalorder %s15, 0
      %p49 = por %p47, %p48
      %p50 = scmp.ne.s32.totalorder %s39, %s42
      %p51 = scmp.eq.s32.totalorder %s20, 1
      %p52 = por %p50, %p51
      %p53 = scmp.ne.s32.totalorder %s42, %s43
      %p54 = scmp.eq.s32.totalorder %s20, 0
      %p55 = por %p53, %p54
      %p56 = scmp.ne.s32.totalorder %s42, %s43
      %p57 = scmp.eq.s32.totalorder %s21, 1
      %p58 = por %p56, %p57
      %p60 = scmp.ne.s32.totalorder %s43, %s59
      %p61 = scmp.eq.s32.totalorder %s21, 0
      %p62 = por %p60, %p61
      %s64 = sadd.s32 %s63, 1
      %p67 = scmp.eq.s32.totalorder %s15, 1
      %p68 = scmp.ne.s32.totalorder %s63, %s65
      %p69 = scmp.eq.s32.totalorder %s15, 0
      %p70 = por %p68, %p69
      %p71 = scmp.ne.s32.totalorder %s63, %s65
      %p72 = scmp.eq.s32.totalorder %s20, 1
      %p73 = por %p71, %p72
      %p74 = scmp.ne.s32.totalorder %s65, %s66
      %p75 = scmp.eq.s32.totalorder %s20, 0
      %p76 = por %p74, %p75
      %p77 = scmp.ne.s32.totalorder %s65, %s66
      %p78 = scmp.eq.s32.totalorder %s21, 1
      %p79 = por %p77, %p78
      %p81 = scmp.ne.s32.totalorder %s66, %s80
      %p82 = scmp.eq.s32.totalorder %s21, 0
      %p83 = por %p81, %p82
      %s85 = sadd.s32 %s84, 1
      %p88 = scmp.eq.s32.totalorder %s15, 1
      %p89 = scmp.ne.s32.totalorder %s84, %s86
      %p90 = scmp.eq.s32.totalorder %s15, 0
      %p91 = por %p89, %p90
      %p92 = scmp.ne.s32.totalorder %s84, %s86
      %p93 = scmp.eq.s32.totalorder %s20, 1
      %p94 = por %p92, %p93
      %p95 = scmp.ne.s32.totalorder %s86, %s87
      %p96 = scmp.eq.s32.totalorder %s20, 0
      %p97 = por %p95, %p96
      %p98 = scmp.ne.s32.totalorder %s86, %s87
      %p99 = scmp.eq.s32.totalorder %s21, 1
      %p100 = por %p98, %p99
      %p102 = scmp.ne.s32.totalorder %s87, %s101
      %p103 = scmp.eq.s32.totalorder %s21, 0
      %p104 = por %p102, %p103
      %s105 = ssub.s32 %s22, %s34
      %p106 = scmp.eq.s32.totalorder %s105, 0
      %s108 = sadd.s32 %s107, 1
      %s109 = scalar_select %p106, %s107, %s108
      %p112 = pneg %p106
      %p113 = scmp.eq.s32.totalorder %s15, 1
      %p114 = por %p112, %p113
      %p115 = scmp.ne.s32.totalorder %s107, %s110
      %p116 = scmp.eq.s32.totalorder %s15, 0
      %p117 = por %p115, %p116
      %p118 = scmp.ne.s32.totalorder %s107, %s110
      %p119 = scmp.eq.s32.totalorder %s20, 1
      %p120 = por %p118, %p119
      %p121 = scmp.ne.s32.totalorder %s110, %s111
      %p122 = scmp.eq.s32.totalorder %s20, 0
      %p123 = por %p121, %p122
      %p124 = scmp.ne.s32.totalorder %s110, %s111
      %p125 = scmp.eq.s32.totalorder %s21, 1
      %p126 = por %p124, %p125
      %p128 = scmp.ne.s32.totalorder %s111, %s127
      %p129 = scmp.eq.s32.totalorder %s21, 0
      %p130 = por %p128, %p129
      %p131 = scmp.le.s32.totalorder 1, %s15
      %p132 = scmp.lt.s32.totalorder %s15, 3
      %p133 = pnand %p131, %p132
      %p134 = pneg %p133
      // Predicated region
      $region9: #{tpu_custom_call.1} parent=5 // pred_check
        _
      $region10: #{tpu_custom_call.1} parent=5 // pred_check_branch
        %136 = sbr.rel (%p133) target = $region12
      $region11: #{tpu_custom_call.1} parent=5 // pred_region
        %s137 = ssub.s32 %s15, 1
        // Predicated region
        $region13: #{tpu_custom_call.1} parent=11 // pred_check
          %p138 = pneg %p76
        $region14: #{tpu_custom_call.1} parent=11 // pred_check_branch
          %140 = sbr.rel (%p138) target = $region16
        $region15: #{tpu_custom_call.1} parent=11 // pred_region
          _
        $region16: #{tpu_custom_call.1} parent=11 // pred_fallthru
          _
        // Predicated region
        $region17: #{tpu_custom_call.1} parent=11 // pred_check
          %p141 = pneg %p97
        $region18: #{tpu_custom_call.1} parent=11 // pred_check_branch
          %143 = sbr.rel (%p141) target = $region20
        $region19: #{tpu_custom_call.1} parent=11 // pred_region
          _
        $region20: #{tpu_custom_call.1} parent=11 // pred_fallthru
          _
      $region12: #{tpu_custom_call.1} parent=5 // pred_fallthru
        _
      %p144 = scmp.lt.s32.totalorder %s15, 2
      // Predicated region
      $region21: #{tpu_custom_call.1} parent=5 // pred_check
        %p145 = pneg %p144
      $region22: #{tpu_custom_call.1} parent=5 // pred_check_branch
        %147 = sbr.rel (%p145) target = $region24
      $region23: #{tpu_custom_call.1} parent=5 // pred_region
        // Predicated region
        $region25: #{tpu_custom_call.1} parent=23 // pred_check
          %p148 = pneg %p49
        $region26: #{tpu_custom_call.1} parent=23 // pred_check_branch
          %150 = sbr.rel (%p148) target = $region28
        $region27: #{tpu_custom_call.1} parent=23 // pred_region
          %s151 = sand.u32 %s39, 1
          %s152 = scalar_lea.sflag [#allocation4], %s151
          %s153 = sand.u32 %s39, 1
          %s154 = smul.addr %s153, 64
          %s155 = scalar_lea.vmem [#allocation3], %s154
          %s156 = smul.u32 2, %s23
          %s158 = ssub.s32 1024, 1024
          %159 = vsyncadd %s152, %s158
          %s160 = smul.addr %s22, 8
          %s161 = sadd.s32 %s156, %s160
          %s162 = smul.addr %s161, 128
          %s163 = scalar_lea.hbm %s0, %s162
          %s164 = sshll.u32 %s155, 4
          %s165 = int_to_ptr.vmem [resolvable:$true] %s164
          %170 = dma.hbm_to_vmem [thread:$0]  %s163, 1024, %s165, %s152, 128, 128, 8
        $region28: #{tpu_custom_call.1} parent=23 // pred_fallthru
          _
      $region24: #{tpu_custom_call.1} parent=5 // pred_fallthru
        _
      %p171 = scmp.le.s32.totalorder 1, %s15
      %p172 = scmp.lt.s32.totalorder %s15, 3
      %p173 = pnand %p171, %p172
      %p174 = pneg %p173
      // Predicated region
      $region29: #{tpu_custom_call.1} parent=5 // pred_check
        _
      $region30: #{tpu_custom_call.1} parent=5 // pred_check_branch
        %176 = sbr.rel (%p173) target = $region32
      $region31: #{tpu_custom_call.1} parent=5 // pred_region
        %s177 = ssub.s32 %s15, 1
        %s178 = sand.u32 %s42, 1
        %s179 = scalar_lea.sflag [#allocation4], %s178
        %s180 = sand.u32 %s42, 1
        %s181 = smul.addr %s180, 64
        %s182 = scalar_lea.vmem [#allocation3], %s181
        // Predicated region
        $region33: #{tpu_custom_call.1} parent=31 // pred_check
          %p183 = pneg %p55
        $region34: #{tpu_custom_call.1} parent=31 // pred_check_branch
          %185 = sbr.rel (%p183) target = $region36
        $region35: #{tpu_custom_call.1} parent=31 // pred_region
          %186 = dma.done %s179, 1024
        $region36: #{tpu_custom_call.1} parent=31 // pred_fallthru
          _
        %s187 = sand.u32 %s42, 1
        %s188 = scalar_lea.sflag [#allocation4], %s187
        %s189 = sand.u32 %s42, 1
        %s190 = smul.addr %s189, 64
        %s191 = scalar_lea.vmem [#allocation3], %s190
        %p192 = pneg %p55
        %p193 = pneg %p52
        %p194 = pneg %p76
        %p195 = pneg %p73
        %p196 = pneg %p97
        %p197 = pneg %p94
        %p198 = pneg %p123
        %p199 = pneg %p120
        %s200 = sand.u32 %s110, 1
        %s201 = scalar_lea.sflag [#allocation5], %s200
        %s202 = sand.u32 %s110, 1
        %s203 = scalar_lea.vmem [#allocation6], %s202
        %s204 = smul.u32 2, %s25
        %p205 = scmp.eq.s32.totalorder %s25, 0
        // Predicated region
        $region37: #{tpu_custom_call.1} parent=31 // pred_check
          %p206 = pneg %p205
        $region38: #{tpu_custom_call.1} parent=31 // pred_check_branch
          %208 = sbr.rel (%p206) target = $region40
        $region39: #{tpu_custom_call.1} parent=31 // pred_region
          %vm209 = vcmask 125952
          %210 = vst.msk [vmem:[#allocation2] sm:$0xf] %vm209, 0.0
          %211 = vst.msk [vmem:[#allocation2 + $0x4] sm:$0xf] %vm209, 0.0
          %212 = vst.msk [vmem:[#allocation2 + $0x8] sm:$0xf] %vm209, 0.0
        $region40: #{tpu_custom_call.1} parent=31 // pred_fallthru
          _
        %v213 = vld [vmem:[%s182] sm:$0xff]
        %v214 = vld [vmem:[%s182 + $0x8] sm:$0xff]
        %v215 = vld [vmem:[%s182 + $0x10] sm:$0xff]
        %v216 = vld [vmem:[%s182 + $0x18] sm:$0xff]
        %v217 = vld [vmem:[%s182 + $0x20] sm:$0xff]
        %v218 = vld [vmem:[%s182 + $0x28] sm:$0xff]
        %v219 = vld [vmem:[%s182 + $0x30] sm:$0xff]
        %v220 = vld [vmem:[%s182 + $0x38] sm:$0xff]
        %vm221 = vcmask 130048
        %v222 = vsel %vm221, %v213, 0.0
        %v223 = vsel %vm221, %v214, 0.0
        %v224 = vadd.f32 %v222, %v223
        %v225 = vrot.slane %v224, 4
        %v226 = vadd.f32 %v224, %v225
        %v227 = vrot.slane %v226, 2
        %v228 = vadd.f32 %v226, %v227
        %v229 = vrot.slane %v228, 1
        %v230 = vadd.f32 %v228, %v229
        %v231 = vsel %vm221, %v215, 0.0
        %v232 = vsel %vm221, %v216, 0.0
        %v233 = vadd.f32 %v231, %v232
        %v234 = vrot.slane %v233, 4
        %v235 = vadd.f32 %v233, %v234
        %v236 = vrot.slane %v235, 2
        %v237 = vadd.f32 %v235, %v236
        %v238 = vrot.slane %v237, 1
        %v239 = vadd.f32 %v237, %v238
        %v240 = vsel %vm221, %v217, 0.0
        %v241 = vsel %vm221, %v218, 0.0
        %v242 = vadd.f32 %v240, %v241
        %v243 = vrot.slane %v242, 4
        %v244 = vadd.f32 %v242, %v243
        %v245 = vrot.slane %v244, 2
        %v246 = vadd.f32 %v244, %v245
        %v247 = vrot.slane %v246, 1
        %v248 = vadd.f32 %v246, %v247
        %v249 = vsel %vm221, %v219, 0.0
        %v250 = vsel %vm221, %v220, 0.0
        %v251 = vadd.f32 %v249, %v250
        %v252 = vrot.slane %v251, 4
        %v253 = vadd.f32 %v251, %v252
        %v254 = vrot.slane %v253, 2
        %v255 = vadd.f32 %v253, %v254
        %v256 = vrot.slane %v255, 1
        %v257 = vadd.f32 %v255, %v256
        %v258 = vld [vmem:[#allocation2] sm:$0xf]
        %vm263 = vcmask 1041409
        %v264 = vsel %vm263, %v239, %v230
        %vm265 = vcmask 1042434
        %v266 = vsel %vm265, %v248, %v264
        %vm267 = vcmask 1043459
        %v268 = vsel %vm267, %v257, %v266
        %v270 = vadd.f32 %v258, %v268
        %vm271 = vcmask 125952
        %272 = vst.msk [vmem:[#allocation2] sm:$0xf] %vm271, %v270
        %s273 = scalar_lea.vmem [#allocation2], 4
        %v274 = vld [vmem:[%s273] sm:$0xf]
        %v275 = vadd.f32 %v274, %v268
        %276 = vst.msk [vmem:[%s273] sm:$0xf] %vm271, %v275
        %s277 = scalar_lea.vmem [#allocation2], 8
        %v278 = vld [vmem:[%s277] sm:$0xf]
        %v279 = vadd.f32 %v278, %v268
        %280 = vst.msk [vmem:[%s277] sm:$0xf] %vm271, %v279
        // Predicated region
        $region41: #{tpu_custom_call.1} parent=31 // pred_check
          %p281 = pneg %p205
        $region42: #{tpu_custom_call.1} parent=31 // pred_check_branch
          %283 = sbr.rel (%p281) target = $region44
        $region43: #{tpu_custom_call.1} parent=31 // pred_region
          %v284 = vld [vmem:[%s273] sm:$0xf]
          %v285 = vld [vmem:[%s182] sm:$0x1]
          %v286 = vld [vmem:[%s182 + $0x10] sm:$0x1]
          %v287 = vld [vmem:[%s182 + $0x20] sm:$0x1]
          %v288 = vld [vmem:[%s182 + $0x30] sm:$0x1]
          %v293 = vrot.slane %v286, 7
          %v294 = vsel %vm263, %v293, %v285
          %v295 = vrot.slane %v287, 6
          %v296 = vsel %vm265, %v295, %v294
          %v297 = vrot.slane %v288, 5
          %v298 = vsel %vm267, %v297, %v296
          %v300 = vsub.f32 %v284, %v298
          %301 = vst.msk [vmem:[%s273] sm:$0xf] %vm271, %v300
          %v302 = vld [vmem:[%s277] sm:$0xf]
          %v303 = vld [vmem:[%s182] sm:$0x1]
          %v304 = vld [vmem:[%s182 + $0x10] sm:$0x1]
          %v305 = vld [vmem:[%s182 + $0x20] sm:$0x1]
          %v306 = vld [vmem:[%s182 + $0x30] sm:$0x1]
          %v311 = vrot.slane %v304, 7
          %v312 = vsel %vm263, %v311, %v303
          %v313 = vrot.slane %v305, 6
          %v314 = vsel %vm265, %v313, %v312
          %v315 = vrot.slane %v306, 5
          %v316 = vsel %vm267, %v315, %v314
          %v318 = vsub.f32 %v302, %v316
          %319 = vst.msk [vmem:[%s277] sm:$0xf] %vm271, %v318
          %v320 = vld [vmem:[%s277] sm:$0xf]
          %v321 = vld [vmem:[%s182 + $0x1] sm:$0x1]
          %v322 = vld [vmem:[%s182 + $0x11] sm:$0x1]
          %v323 = vld [vmem:[%s182 + $0x21] sm:$0x1]
          %v324 = vld [vmem:[%s182 + $0x31] sm:$0x1]
          %v329 = vrot.slane %v322, 7
          %v330 = vsel %vm263, %v329, %v321
          %v331 = vrot.slane %v323, 6
          %v332 = vsel %vm265, %v331, %v330
          %v333 = vrot.slane %v324, 5
          %v334 = vsel %vm267, %v333, %v332
          %v336 = vsub.f32 %v320, %v334
          %337 = vst.msk [vmem:[%s277] sm:$0xf] %vm271, %v336
          %v338 = vld [vmem:[#allocation2] sm:$0xf]
          %v339 = vld [vmem:[%s182 + $0xf] sm:$0x1]
          %v340 = vld [vmem:[%s182 + $0x1f] sm:$0x1]
          %v341 = vld [vmem:[%s182 + $0x2f] sm:$0x1]
          %v342 = vld [vmem:[%s182 + $0x3f] sm:$0x1]
          %v347 = vrot.slane %v340, 7
          %v348 = vsel %vm263, %v347, %v339
          %v349 = vrot.slane %v341, 6
          %v350 = vsel %vm265, %v349, %v348
          %v351 = vrot.slane %v342, 5
          %v352 = vsel %vm267, %v351, %v350
          %v354 = vsub.f32 %v338, %v352
          %355 = vst.msk [vmem:[#allocation2] sm:$0xf] %vm271, %v354
          %v356 = vld [vmem:[#allocation2] sm:$0xf]
          %v357 = vld [vmem:[%s182 + $0xe] sm:$0x1]
          %v358 = vld [vmem:[%s182 + $0x1e] sm:$0x1]
          %v359 = vld [vmem:[%s182 + $0x2e] sm:$0x1]
          %v360 = vld [vmem:[%s182 + $0x3e] sm:$0x1]
          %v365 = vrot.slane %v358, 7
          %v366 = vsel %vm263, %v365, %v357
          %v367 = vrot.slane %v359, 6
          %v368 = vsel %vm265, %v367, %v366
          %v369 = vrot.slane %v360, 5
          %v370 = vsel %vm267, %v369, %v368
          %v372 = vsub.f32 %v356, %v370
          %373 = vst.msk [vmem:[#allocation2] sm:$0xf] %vm271, %v372
          %v374 = vld [vmem:[%s273] sm:$0xf]
          %v375 = vld [vmem:[%s182 + $0xf] sm:$0x1]
          %v376 = vld [vmem:[%s182 + $0x1f] sm:$0x1]
          %v377 = vld [vmem:[%s182 + $0x2f] sm:$0x1]
          %v378 = vld [vmem:[%s182 + $0x3f] sm:$0x1]
          %v383 = vrot.slane %v376, 7
          %v384 = vsel %vm263, %v383, %v375
          %v385 = vrot.slane %v377, 6
          %v386 = vsel %vm265, %v385, %v384
          %v387 = vrot.slane %v378, 5
          %v388 = vsel %vm267, %v387, %v386
          %v390 = vsub.f32 %v374, %v388
          %391 = vst.msk [vmem:[%s273] sm:$0xf] %vm271, %v390
          %v392 = vld [vmem:[#allocation2] sm:$0xf]
          %v393 = vsel %vm271, %v392, 0.0
          %394 = vadd.xlane.f32.xlu0 %v393
          %v395 = vpop.xlane.xlu0 %394
          %v396 = vsub.f32 %v395, %v392
          %398 = vrot.lane.b32.xlu0 %v392, 127
          %v399 = vpop.permute.xlu0 %398
          %v401 = vsub.f32 %v396, %v399
          %402 = vrot.lane.b32.xlu0 %v392, 113
          %v403 = vpop.permute.xlu0 %402
          %v405 = vsub.f32 %v396, %v403
          %v406 = vld [vmem:[%s273] sm:$0xf]
          %v407 = vsel %vm271, %v406, 0.0
          %408 = vadd.xlane.f32.xlu0 %v407
          %v409 = vpop.xlane.xlu0 %408
          %v410 = vsub.f32 %v409, %v406
          %412 = vrot.lane.b32.xlu0 %v406, 127
          %v413 = vpop.permute.xlu0 %412
          %v415 = vsub.f32 %v410, %v413
          %416 = vrot.lane.b32.xlu0 %v406, 113
          %v417 = vpop.permute.xlu0 %416
          %v419 = vsub.f32 %v410, %v417
          %v420 = vld [vmem:[%s277] sm:$0xf]
          %v421 = vsel %vm271, %v420, 0.0
          %422 = vadd.xlane.f32.xlu0 %v421
          %v423 = vpop.xlane.xlu0 %422
          %v424 = vsub.f32 %v423, %v420
          %426 = vrot.lane.b32.xlu0 %v420, 127
          %v427 = vpop.permute.xlu0 %426
          %v429 = vsub.f32 %v424, %v427
          %430 = vrot.lane.b32.xlu0 %v420, 113
          %v431 = vpop.permute.xlu0 %430
          %v433 = vsub.f32 %v424, %v431
          %435 = vset.pattern.permute.xlu0 14
          %436 = vperm.xlu0 %435, %v401
          %v437 = vpop.permute.xlu0 %436
          %v438 = vlaneseq
          %v439 = vand.u32 %v438, 127
          %v440 = vlaneseq
          %v441 = vshrl.u32 %v440, 7
          %v442 = vsub.s32 %v439, %v441
          %v443 = vrot.slane %v437, %v442
          %446 = vset.pattern.permute.xlu0 0
          %447 = vperm.xlu0 %446, %v405
          %v448 = vpop.permute.xlu0 %447
          %v449 = vadd.s32 %v439, 4294967292
          %v450 = vlaneseq
          %v451 = vshrl.u32 %v450, 7
          %v452 = vsub.s32 %v449, %v451
          %v453 = vrot.slane %v448, %v452
          %455 = vset.pattern.permute.xlu0 0
          %456 = vperm.xlu0 %455, %v401
          %v457 = vpop.permute.xlu0 %456
          %v458 = vadd.s32 %v439, 4294967288
          %v459 = vlaneseq
          %v460 = vshrl.u32 %v459, 7
          %v461 = vsub.s32 %v458, %v460
          %v462 = vrot.slane %v457, %v461
          %465 = vset.pattern.permute.xlu0 14
          %466 = vperm.xlu0 %465, %v415
          %v467 = vpop.permute.xlu0 %466
          %v468 = vadd.s32 %v439, 4294967284
          %v469 = vlaneseq
          %v470 = vshrl.u32 %v469, 7
          %v471 = vsub.s32 %v468, %v470
          %v472 = vrot.slane %v467, %v471
          %475 = vset.pattern.permute.xlu0 0
          %476 = vperm.xlu0 %475, %v419
          %v477 = vpop.permute.xlu0 %476
          %v478 = vadd.s32 %v439, 4294967280
          %v479 = vlaneseq
          %v480 = vshrl.u32 %v479, 7
          %v481 = vsub.s32 %v478, %v480
          %v482 = vrot.slane %v477, %v481
          %484 = vset.pattern.permute.xlu0 0
          %485 = vperm.xlu0 %484, %v415
          %v486 = vpop.permute.xlu0 %485
          %v487 = vadd.s32 %v439, 4294967276
          %v488 = vlaneseq
          %v489 = vshrl.u32 %v488, 7
          %v490 = vsub.s32 %v487, %v489
          %v491 = vrot.slane %v486, %v490
          %494 = vset.pattern.permute.xlu0 14
          %495 = vperm.xlu0 %494, %v429
          %v496 = vpop.permute.xlu0 %495
          %v497 = vadd.s32 %v439, 4294967272
          %v498 = vlaneseq
          %v499 = vshrl.u32 %v498, 7
          %v500 = vsub.s32 %v497, %v499
          %v501 = vrot.slane %v496, %v500
          %504 = vset.pattern.permute.xlu0 0
          %505 = vperm.xlu0 %504, %v433
          %v506 = vpop.permute.xlu0 %505
          %v507 = vadd.s32 %v439, 4294967268
          %v508 = vlaneseq
          %v509 = vshrl.u32 %v508, 7
          %v510 = vsub.s32 %v507, %v509
          %v511 = vrot.slane %v506, %v510
          %513 = vset.pattern.permute.xlu0 0
          %514 = vperm.xlu0 %513, %v429
          %v515 = vpop.permute.xlu0 %514
          %v516 = vadd.s32 %v439, 4294967264
          %v517 = vlaneseq
          %v518 = vshrl.u32 %v517, 7
          %v519 = vsub.s32 %v516, %v518
          %v520 = vrot.slane %v515, %v519
          %vm522 = vcmask 31744
          %v523 = vsel %vm522, %v443, %v453
          %vm524 = vcmask 64512
          %v525 = vsel %vm524, %v523, %v462
          %vm526 = vcmask 97280
          %v527 = vsel %vm526, %v525, %v472
          %v528 = vsel %vm221, %v527, %v482
          %vm529 = vcmask 162816
          %v530 = vsel %vm529, %v528, %v491
          %vm531 = vcmask 195584
          %v532 = vsel %vm531, %v530, %v501
          %vm533 = vcmask 228352
          %v534 = vsel %vm533, %v532, %v511
          %vm535 = vcmask 261120
          %v536 = vsel %vm535, %v534, %v520
          %v537 = vld [vmem:[%s1] sm:$0xff]
          %v538 = vld [vmem:[%s1 + $0x8] sm:$0xff]
          %v539 = vld [vmem:[%s1 + $0x10] sm:$0xff]
          %v540 = vld [vmem:[%s1 + $0x18] sm:$0xff]
          %v541 = vld [vmem:[%s1 + $0x20] sm:$0xf]
          %vm542 = vcmask 293888
          %v544 = vsel %vm542, %v536, 0
          %vm546 = vcmask 1043456
          %v548 = vsel %vm546, %v541, 0
          %550 = vmatprep.subr.mxu0 0.0
          %551 = vmatpush1.msra.mxu0 %v537
          %552 = vmatprep.subr.mxu0 0.0
          %553 = vmatpush1.msra.mxu0 %v538
          %554 = vmatprep.subr.mxu0 0.0
          %555 = vmatpush1.msra.mxu0 %v539
          %556 = vmatprep.subr.mxu0 0.0
          %557 = vmatpush1.msra.mxu0 %v540
          %558 = vmatprep.subr.mxu0 0.0
          %559 = vmatpush1.msra.mxu0 %v548
          %560 = vmatprep.subr.mxu0 0.0
          %561 = vmatpush1.msra.mxu0 0.0
          %562 = vmatprep.subr.mxu0 0.0
          %563 = vmatpush1.msra.mxu0 0.0
          %564 = vmatprep.subr.mxu0 0.0
          %565 = vmatpush1.msra.mxu0 0.0
          %566 = vmatprep.subr.mxu0 0.0
          %567 = vmatpush1.msra.mxu0 0.0
          %568 = vmatprep.subr.mxu0 0.0
          %569 = vmatpush1.msra.mxu0 0.0
          %570 = vmatprep.subr.mxu0 0.0
          %571 = vmatpush1.msra.mxu0 0.0
          %572 = vmatprep.subr.mxu0 0.0
          %573 = vmatpush1.msra.mxu0 0.0
          %574 = vmatprep.subr.mxu0 0.0
          %575 = vmatpush1.msra.mxu0 0.0
          %576 = vmatprep.subr.mxu0 0.0
          %577 = vmatpush1.msra.mxu0 0.0
          %578 = vmatprep.subr.mxu0 0.0
          %579 = vmatpush1.msra.mxu0 0.0
          %580 = vmatprep.subr.mxu0 0.0
          %581 = vmatpush1.msra.mxu0 0.0
          %582 = vmatprep.subr.mxu0 0.0
          %583 = vmatpush1.msra.mxu0 0.0
          %584 = vmatprep.subr.mxu0 0.0
          %585 = vmatpush1.msra.mxu0 0.0
          %586 = vmatprep.subr.mxu0 0.0
          %587 = vmatpush1.msra.mxu0 0.0
          %588 = vmatprep.subr.mxu0 0.0
          %589 = vmatpush1.msra.mxu0 0.0
          %590 = vmatprep.subr.mxu0 0.0
          %591 = vmatpush1.msra.mxu0 0.0
          %592 = vmatprep.subr.mxu0 0.0
          %593 = vmatpush1.msra.mxu0 0.0
          %594 = vmatprep.subr.mxu0 0.0
          %595 = vmatpush1.msra.mxu0 0.0
          %596 = vmatprep.subr.mxu0 0.0
          %597 = vmatpush1.msra.mxu0 0.0
          %598 = vmatprep.subr.mxu0 0.0
          %599 = vmatpush1.msra.mxu0 0.0
          %600 = vmatprep.subr.mxu0 0.0
          %601 = vmatpush1.msra.mxu0 0.0
          %602 = vmatprep.subr.mxu0 0.0
          %603 = vmatpush1.msra.mxu0 0.0
          %604 = vmatprep.subr.mxu0 0.0
          %605 = vmatpush1.msra.mxu0 0.0
          %606 = vmatprep.subr.mxu0 0.0
          %607 = vmatpush1.msra.mxu0 0.0
          %608 = vmatprep.subr.mxu0 0.0
          %609 = vmatpush1.msra.mxu0 0.0
          %610 = vmatprep.subr.mxu0 0.0
          %611 = vmatpush1.msra.mxu0 0.0
          %612 = vmatprep.subr.mxu0 0.0
          %613 = vmatpush1.msra.mxu0 0.0
          %614 = vmatprep.mubr.f32.mxu0 0.0
          %615 = vmatmul.mubr.f32.gmra.mrb[0].mxu0 %v544
          %v616 = vpop.f32.mrb[0].mxu0
          %v617 = vadd.f32 0.0, %v616
          %v618 = vpop.f32.mrb[0].mxu0
          %619 = vdwg.mxu0
          %v620 = vmul.f32 %v617, 0.0051020407
          %v621 = vld [vmem:[%s2] sm:$0x1]
          %v622 = vadd.f32 %v620, %v621
          %vm623 = vcmask 57344
          %624 = vst.msk [vmem:[%s203] sm:$0x1] %vm623, %v622
        $region44: #{tpu_custom_call.1} parent=31 // pred_fallthru
          _
        %s625 = sand.u32 %s110, 1
        %s626 = scalar_lea.sflag [#allocation5], %s625
        %s627 = sand.u32 %s110, 1
        %s628 = scalar_lea.vmem [#allocation6], %s627
        // Predicated region
        $region45: #{tpu_custom_call.1} parent=31 // pred_check
          %p629 = pneg %p120
        $region46: #{tpu_custom_call.1} parent=31 // pred_check_branch
          %631 = sbr.rel (%p629) target = $region48
        $region47: #{tpu_custom_call.1} parent=31 // pred_region
          %s633 = ssub.s32 16, 16
          %634 = vsyncadd %s626, %s633
          %s635 = smul.addr %s24, 16
          %s636 = scalar_lea.hbm %s3, %s635
          %s638 = sshll.u32 %s628, 4
          %s639 = int_to_ptr.vmem [resolvable:$true] %s638
          %641 = dma.vmem_to_hbm [thread:$0]  %s639, 16, %s636, %s626
        $region48: #{tpu_custom_call.1} parent=31 // pred_fallthru
          _
      $region32: #{tpu_custom_call.1} parent=5 // pred_fallthru
        _
      %p642 = scmp.le.s32.totalorder 2, %s15
      // Predicated region
      $region49: #{tpu_custom_call.1} parent=5 // pred_check
        %p643 = pneg %p642
      $region50: #{tpu_custom_call.1} parent=5 // pred_check_branch
        %645 = sbr.rel (%p643) target = $region52
      $region51: #{tpu_custom_call.1} parent=5 // pred_region
        %s646 = ssub.s32 %s15, 2
        // Predicated region
        $region53: #{tpu_custom_call.1} parent=51 // pred_check
          %p647 = pneg %p126
        $region54: #{tpu_custom_call.1} parent=51 // pred_check_branch
          %649 = sbr.rel (%p647) target = $region56
        $region55: #{tpu_custom_call.1} parent=51 // pred_region
          %s650 = sand.u32 %s111, 1
          %s651 = scalar_lea.sflag [#allocation5], %s650
          %s652 = sand.u32 %s111, 1
          %s653 = scalar_lea.vmem [#allocation6], %s652
          %654 = dma.done %s651, 16
        $region56: #{tpu_custom_call.1} parent=51 // pred_fallthru
          _
      $region52: #{tpu_custom_call.1} parent=5 // pred_fallthru
        _
    $region6: #{tpu_custom_call.1} parent=1 // loop_footer
      %s19 = sadd.s32 1, %s15
    $region7: #{tpu_custom_call.1} parent=1 // loop_footer_branch
      %14 = sbr.rel target = $region3
    $region8: #{tpu_custom_call.1} parent=1 // loop_exit
      _
    %655 = vsyncpa [#allocation4], 1
    %s656 = scalar_lea.sflag [#allocation4], 1
    %657 = vsyncpa %s656, 1
    %658 = vsyncpa [#allocation5], 1
    %s659 = scalar_lea.sflag [#allocation5], 1
    %660 = vsyncpa %s659, 1

</llo_original>
